<compile_context>
chip_gen: v7x
topology: tpu7x:2x2x1
jax: 0.10.0
libtpu: 0.0.40
codegen_flags: <defaults>
</compile_context>

<pallas_src>
import jax
import jax.numpy as jnp
from jax.experimental import pallas as pl
from jax.experimental.pallas import tpu as pltpu


def _leaky_relu(h, alpha=0.2):
    return jnp.where(h > 0, h, alpha * h)


def affine_half_flow_kernel(x0t_ref, x1t_ref, w1t_ref, w234t_ref, b_ref,
                            z1t_ref, logdet_ref):
    """One batch tile; everything transposed: (features, TB) with batch on lanes."""
    half = x1t_ref.shape[0]
    nh2 = w234t_ref.shape[1]          # 2 * nh (fused s|t hidden width)

    x0t = x0t_ref[...]                # (half, TB) f32
    x1t = x1t_ref[...]                # (half, TB) f32

    # Fused 4-layer MLP (s and t paths side by side): h = W^T @ x (+ bias col).
    h = jnp.dot(w1t_ref[...], x0t, preferred_element_type=jnp.float32)
    h = _leaky_relu(h + b_ref[0:nh2, :])
    h = jnp.dot(w234t_ref[0:nh2, :], h, preferred_element_type=jnp.float32)
    h = _leaky_relu(h + b_ref[nh2:2 * nh2, :])
    h = jnp.dot(w234t_ref[nh2:2 * nh2, :], h, preferred_element_type=jnp.float32)
    h = _leaky_relu(h + b_ref[2 * nh2:3 * nh2, :])
    st = jnp.dot(w234t_ref[2 * nh2:2 * nh2 + 2 * half, :], h,
                 preferred_element_type=jnp.float32)
    st = st + b_ref[3 * nh2:3 * nh2 + 2 * half, :]        # (2*half, TB)

    s = st[0:half, :]                                     # (half, TB)
    t = st[half:2 * half, :]                              # (half, TB)

    z1t_ref[...] = jnp.exp(s) * x1t + t                   # lane-dense store
    logdet_ref[...] = jnp.sum(s, axis=0, keepdims=True)   # (1, TB), lane-dense


def _block_diag(a, b):
    ra, ca = a.shape
    rb, cb = b.shape
    return jnp.block([[a, jnp.zeros((ra, cb), a.dtype)],
                      [jnp.zeros((rb, ca), b.dtype), b]])


def _pack_fused_params(s_params, t_params):
    """Fuse the s/t MLPs into one MLP; pack transposed weights into 3 arrays."""
    sw1, sb1, sw2, sb2, sw3, sb3, sw4, sb4 = s_params
    tw1, tb1, tw2, tb2, tw3, tb3, tw4, tb4 = t_params

    w1t = jnp.concatenate([sw1.T, tw1.T], axis=0)          # (2nh, half)
    w2t = _block_diag(sw2.T, tw2.T)                        # (2nh, 2nh)
    w3t = _block_diag(sw3.T, tw3.T)                        # (2nh, 2nh)
    w4t = _block_diag(sw4.T, tw4.T)                        # (2half, 2nh)
    w234t = jnp.concatenate([w2t, w3t, w4t], axis=0)       # (4nh + 2half, 2nh)

    bcol = jnp.concatenate([
        jnp.concatenate([sb1, tb1], axis=1).T,             # (2nh, 1)
        jnp.concatenate([sb2, tb2], axis=1).T,
        jnp.concatenate([sb3, tb3], axis=1).T,
        jnp.concatenate([sb4, tb4], axis=1).T,             # (2half, 1)
    ], axis=0)                                             # (3*2nh + 2half, 1)
    return w1t, w234t, bcol


def affine_half_flow_forward(x, s_params, t_params, parity=False, block_b=128):
    """Forward of AffineHalfFlow: returns (z, log_det)."""
    B, dim = x.shape
    half = dim // 2

    # even/odd split (wrapper-side layout glue; XLA fuses it with the transpose)
    x0, x1 = x[:, ::2], x[:, 1::2]
    if parity:
        x0, x1 = x1, x0

    w1t, w234t, bcol = _pack_fused_params(s_params, t_params)

    nb = pl.cdiv(B, block_b)
    Bp = nb * block_b
    x0t = x0.T.astype(jnp.float32)                         # (half, B)
    x1t = x1.T.astype(jnp.float32)
    if Bp != B:
        x0t = jnp.pad(x0t, ((0, 0), (0, Bp - B)))
        x1t = jnp.pad(x1t, ((0, 0), (0, Bp - B)))

    z1t, ldt = pl.pallas_call(
        affine_half_flow_kernel,
        out_shape=(
            jax.ShapeDtypeStruct((half, Bp), jnp.float32),
            jax.ShapeDtypeStruct((1, Bp), jnp.float32),
        ),
        grid=(nb,),
        in_specs=[
            pl.BlockSpec((half, block_b), lambda i: (0, i)),   # x0^T batch tile
            pl.BlockSpec((half, block_b), lambda i: (0, i)),   # x1^T batch tile
            pl.BlockSpec(w1t.shape, lambda i: (0, 0)),         # VMEM-resident weights
            pl.BlockSpec(w234t.shape, lambda i: (0, 0)),
            pl.BlockSpec(bcol.shape, lambda i: (0, 0)),
        ],
        out_specs=(
            pl.BlockSpec((half, block_b), lambda i: (0, i)),   # z1^T tile
            pl.BlockSpec((1, block_b), lambda i: (0, i)),      # log_det tile
        ),
        compiler_params=pltpu.CompilerParams(
            dimension_semantics=("parallel",),
        ),
    )(x0t, x1t, w1t, w234t, bcol)

    z1 = z1t[:, :B].T                                      # (B, half)
    log_det = ldt[0, :B]                                   # (B,)

    z0 = x0
    if parity:
        z0, z1 = z1, z0
    # re-interleave: z[:, ::2] = z0 ; z[:, 1::2] = z1
    z = jnp.stack([z0, z1], axis=2).reshape(B, dim)
    return z, log_det


def _init_mlp_params(key, nin, nout, nh):
    """4-layer MLP (Linear + LeakyReLU x3 + Linear), PyTorch-style uniform init.
    Weights stored as (in, out) so the reference computes x @ W + b."""
    dims = [(nin, nh), (nh, nh), (nh, nh), (nh, nout)]
    params = []
    for (fi, fo) in dims:
        key, kw, kb = jax.random.split(key, 3)
        bound = 1.0 / jnp.sqrt(fi)
        w = jax.random.uniform(kw, (fi, fo), jnp.float32, -bound, bound)
        b = jax.random.uniform(kb, (1, fo), jnp.float32, -bound, bound)
        params += [w, b]
    return params, key


def _reference_forward(x, s_params, t_params, parity=False):
    """Pure-JAX reference, mirroring the PyTorch module exactly."""
    def mlp(h, p):
        for i in range(0, 8, 2):
            h = h @ p[i] + p[i + 1][0]
            if i < 6:
                h = jnp.where(h > 0, h, 0.2 * h)
        return h

    x0, x1 = x[:, ::2], x[:, 1::2]
    if parity:
        x0, x1 = x1, x0
    s = mlp(x0, s_params)
    t = mlp(x0, t_params)
    z0, z1 = x0, jnp.exp(s) * x1 + t
    if parity:
        z0, z1 = z1, z0
    z = jnp.stack([z0, z1], axis=2).reshape(x.shape)
    return z, jnp.sum(s, axis=1)


if __name__ == "__main__":
    B, dim, nh = 256, 8, 24

    key = jax.random.PRNGKey(0)
    key, kx = jax.random.split(key)
    x = jax.random.normal(kx, (B, dim), jnp.float32)

    s_params, key = _init_mlp_params(key, dim // 2, dim // 2, nh)
    t_params, key = _init_mlp_params(key, dim // 2, dim // 2, nh)

    for parity in (False, True):
        z, log_det = affine_half_flow_forward(x, s_params, t_params, parity=parity)
        z = jax.block_until_ready(z)
        log_det = jax.block_until_ready(log_det)

        z_ref, ld_ref = _reference_forward(x, s_params, t_params, parity=parity)
        assert z.shape == (B, dim) and log_det.shape == (B,)
        assert jnp.allclose(z, z_ref, atol=1e-4, rtol=1e-4), \
            float(jnp.max(jnp.abs(z - z_ref)))
        assert jnp.allclose(log_det, ld_ref, atol=1e-4, rtol=1e-4), \
            float(jnp.max(jnp.abs(log_det - ld_ref)))

    print("KERNEL_OK")
</pallas_src>

<mosaic_0001>
module attributes {stable_mosaic.version = 11 : i64} {
  func.func @affine_half_flow_kernel(%arg0: i32, %arg1: memref<4x128xf32, #tpu.memory_space<vmem>>, %arg2: memref<4x128xf32, #tpu.memory_space<vmem>>, %arg3: memref<48x4xf32, #tpu.memory_space<vmem>>, %arg4: memref<104x48xf32, #tpu.memory_space<vmem>>, %arg5: memref<152x1xf32, #tpu.memory_space<vmem>>, %arg6: memref<4x128xf32, #tpu.memory_space<vmem>>, %arg7: memref<1x128xf32, #tpu.memory_space<vmem>>) attributes {dimension_semantics = [#tpu.dimension_semantics<parallel>], iteration_bounds = array<i64: 2>, scalar_prefetch = 0 : i64, scratch_operands = 0 : i64, tpu.core_type = #tpu.core_type<tc>, window_params = [{transform_indices = @transform_0, window_bounds = array<i64: 4, 128>}, {transform_indices = @transform_1, window_bounds = array<i64: 4, 128>}, {pipeline_mode = #tpu.pipeline_mode<synchronous>, transform_indices = @transform_2, window_bounds = array<i64: 48, 4>}, {pipeline_mode = #tpu.pipeline_mode<synchronous>, transform_indices = @transform_3, window_bounds = array<i64: 104, 48>}, {pipeline_mode = #tpu.pipeline_mode<synchronous>, transform_indices = @transform_4, window_bounds = array<i64: 152, 1>}, {transform_indices = @transform_5, window_bounds = array<i64: 4, 128>}, {transform_indices = @transform_6, window_bounds = array<i64: 1, 128>}]} {
    %c0 = arith.constant 0 : index
    %c0_0 = arith.constant 0 : index
    %0 = vector.load %arg1[%c0, %c0_0] : memref<4x128xf32, #tpu.memory_space<vmem>>, vector<4x128xf32>
    %c0_1 = arith.constant 0 : index
    %c0_2 = arith.constant 0 : index
    %1 = vector.load %arg2[%c0_1, %c0_2] : memref<4x128xf32, #tpu.memory_space<vmem>>, vector<4x128xf32>
    %c0_3 = arith.constant 0 : index
    %c0_4 = arith.constant 0 : index
    %2 = vector.load %arg3[%c0_3, %c0_4] : memref<48x4xf32, #tpu.memory_space<vmem>>, vector<48x4xf32>
    %cst = arith.constant dense<0.000000e+00> : vector<48x128xf32>
    %3 = tpu.matmul %2, %0, %cst {dimension_numbers = #tpu.dot_dimension_numbers<[1], [0], [0], [1], [0, 0, 1, 1], [], []>} : vector<48x4xf32>, vector<4x128xf32>, vector<48x128xf32> -> vector<48x128xf32>
    %c0_5 = arith.constant 0 : index
    %c0_6 = arith.constant 0 : index
    %4 = vector.load %arg5[%c0_5, %c0_6] : memref<152x1xf32, #tpu.memory_space<vmem>>, vector<48x1xf32>
    %5 = vector.broadcast %4 : vector<48x1xf32> to vector<48x128xf32>
    %6 = arith.addf %3, %5 : vector<48x128xf32>
    %cst_7 = arith.constant 0.000000e+00 : f32
    %7 = vector.broadcast %cst_7 : f32 to vector<48x128xf32>
    %8 = arith.cmpf ogt, %6, %7 : vector<48x128xf32>
    %cst_8 = arith.constant 2.000000e-01 : f32
    %9 = vector.broadcast %cst_8 : f32 to vector<48x128xf32>
    %10 = arith.mulf %9, %6 : vector<48x128xf32>
    %11 = arith.select %8, %6, %10 : vector<48x128xi1>, vector<48x128xf32>
    %c0_9 = arith.constant 0 : index
    %c0_10 = arith.constant 0 : index
    %12 = vector.load %arg4[%c0_9, %c0_10] : memref<104x48xf32, #tpu.memory_space<vmem>>, vector<48x48xf32>
    %cst_11 = arith.constant dense<0.000000e+00> : vector<48x128xf32>
    %13 = tpu.matmul %12, %11, %cst_11 {dimension_numbers = #tpu.dot_dimension_numbers<[1], [0], [0], [1], [0, 0, 1, 1], [], []>} : vector<48x48xf32>, vector<48x128xf32>, vector<48x128xf32> -> vector<48x128xf32>
    %c48 = arith.constant 48 : index
    %c0_12 = arith.constant 0 : index
    %14 = vector.load %arg5[%c48, %c0_12] : memref<152x1xf32, #tpu.memory_space<vmem>>, vector<48x1xf32>
    %15 = vector.broadcast %14 : vector<48x1xf32> to vector<48x128xf32>
    %16 = arith.addf %13, %15 : vector<48x128xf32>
    %cst_13 = arith.constant 0.000000e+00 : f32
    %17 = vector.broadcast %cst_13 : f32 to vector<48x128xf32>
    %18 = arith.cmpf ogt, %16, %17 : vector<48x128xf32>
    %cst_14 = arith.constant 2.000000e-01 : f32
    %19 = vector.broadcast %cst_14 : f32 to vector<48x128xf32>
    %20 = arith.mulf %19, %16 : vector<48x128xf32>
    %21 = arith.select %18, %16, %20 : vector<48x128xi1>, vector<48x128xf32>
    %c48_15 = arith.constant 48 : index
    %c0_16 = arith.constant 0 : index
    %22 = vector.load %arg4[%c48_15, %c0_16] : memref<104x48xf32, #tpu.memory_space<vmem>>, vector<48x48xf32>
    %cst_17 = arith.constant dense<0.000000e+00> : vector<48x128xf32>
    %23 = tpu.matmul %22, %21, %cst_17 {dimension_numbers = #tpu.dot_dimension_numbers<[1], [0], [0], [1], [0, 0, 1, 1], [], []>} : vector<48x48xf32>, vector<48x128xf32>, vector<48x128xf32> -> vector<48x128xf32>
    %c96 = arith.constant 96 : index
    %c0_18 = arith.constant 0 : index
    %24 = vector.load %arg5[%c96, %c0_18] : memref<152x1xf32, #tpu.memory_space<vmem>>, vector<48x1xf32>
    %25 = vector.broadcast %24 : vector<48x1xf32> to vector<48x128xf32>
    %26 = arith.addf %23, %25 : vector<48x128xf32>
    %cst_19 = arith.constant 0.000000e+00 : f32
    %27 = vector.broadcast %cst_19 : f32 to vector<48x128xf32>
    %28 = arith.cmpf ogt, %26, %27 : vector<48x128xf32>
    %cst_20 = arith.constant 2.000000e-01 : f32
    %29 = vector.broadcast %cst_20 : f32 to vector<48x128xf32>
    %30 = arith.mulf %29, %26 : vector<48x128xf32>
    %31 = arith.select %28, %26, %30 : vector<48x128xi1>, vector<48x128xf32>
    %c96_21 = arith.constant 96 : index
    %c0_22 = arith.constant 0 : index
    %32 = vector.load %arg4[%c96_21, %c0_22] : memref<104x48xf32, #tpu.memory_space<vmem>>, vector<8x48xf32>
    %cst_23 = arith.constant dense<0.000000e+00> : vector<8x128xf32>
    %33 = tpu.matmul %32, %31, %cst_23 {dimension_numbers = #tpu.dot_dimension_numbers<[1], [0], [0], [1], [0, 0, 1, 1], [], []>} : vector<8x48xf32>, vector<48x128xf32>, vector<8x128xf32> -> vector<8x128xf32>
    %c144 = arith.constant 144 : index
    %c0_24 = arith.constant 0 : index
    %34 = vector.load %arg5[%c144, %c0_24] : memref<152x1xf32, #tpu.memory_space<vmem>>, vector<8x1xf32>
    %35 = vector.broadcast %34 : vector<8x1xf32> to vector<8x128xf32>
    %36 = arith.addf %33, %35 : vector<8x128xf32>
    %37 = vector.extract_strided_slice %36 {offsets = [0, 0], sizes = [4, 128], strides = [1, 1]} : vector<8x128xf32> to vector<4x128xf32>
    %38 = vector.extract_strided_slice %36 {offsets = [4, 0], sizes = [4, 128], strides = [1, 1]} : vector<8x128xf32> to vector<4x128xf32>
    %39 = math.exp %37 : vector<4x128xf32>
    %40 = arith.mulf %39, %1 : vector<4x128xf32>
    %41 = arith.addf %40, %38 : vector<4x128xf32>
    %c0_25 = arith.constant 0 : index
    %c0_26 = arith.constant 0 : index
    %42 = vector.load %arg6[%c0_25, %c0_26] : memref<4x128xf32, #tpu.memory_space<vmem>>, vector<4x128xf32>
    tpu.vector_store %arg6[%c0_25, %c0_26], %41 {strides = array<i32>} : memref<4x128xf32, #tpu.memory_space<vmem>>, vector<4x128xf32>,
    %cst_27 = arith.constant dense<0.000000e+00> : vector<128xf32>
    %43 = vector.multi_reduction <add>, %37, %cst_27 [0] : vector<4x128xf32> to vector<128xf32>
    %44 = vector.shape_cast %43 : vector<128xf32> to vector<1x128xf32>
    %c0_28 = arith.constant 0 : index
    %c0_29 = arith.constant 0 : index
    %45 = vector.load %arg7[%c0_28, %c0_29] : memref<1x128xf32, #tpu.memory_space<vmem>>, vector<1x128xf32>
    tpu.vector_store %arg7[%c0_28, %c0_29], %44 {strides = array<i32>} : memref<1x128xf32, #tpu.memory_space<vmem>>, vector<1x128xf32>,
    return
  }
  func.func @transform_0(%arg0: i32) -> (i32, i32) {
    %c0_i32 = arith.constant 0 : i32
    %c0_i32_0 = arith.constant 0 : i32
    return %c0_i32, %arg0 : i32, i32
  }
  func.func @transform_1(%arg0: i32) -> (i32, i32) {
    %c0_i32 = arith.constant 0 : i32
    %c0_i32_0 = arith.constant 0 : i32
    return %c0_i32, %arg0 : i32, i32
  }
  func.func @transform_2(%arg0: i32) -> (i32, i32) {
    %c0_i32 = arith.constant 0 : i32
    %c0_i32_0 = arith.constant 0 : i32
    %c0_i32_1 = arith.constant 0 : i32
    return %c0_i32, %c0_i32_0 : i32, i32
  }
  func.func @transform_3(%arg0: i32) -> (i32, i32) {
    %c0_i32 = arith.constant 0 : i32
    %c0_i32_0 = arith.constant 0 : i32
    %c0_i32_1 = arith.constant 0 : i32
    return %c0_i32, %c0_i32_0 : i32, i32
  }
  func.func @transform_4(%arg0: i32) -> (i32, i32) {
    %c0_i32 = arith.constant 0 : i32
    %c0_i32_0 = arith.constant 0 : i32
    %c0_i32_1 = arith.constant 0 : i32
    return %c0_i32, %c0_i32_0 : i32, i32
  }
  func.func @transform_5(%arg0: i32) -> (i32, i32) {
    %c0_i32 = arith.constant 0 : i32
    %c0_i32_0 = arith.constant 0 : i32
    return %c0_i32, %arg0 : i32, i32
  }
  func.func @transform_6(%arg0: i32) -> (i32, i32) {
    %c0_i32 = arith.constant 0 : i32
    %c0_i32_0 = arith.constant 0 : i32
    return %c0_i32, %arg0 : i32, i32
  }
}

</mosaic_0001>

<llo_original>
// kernel: tpu_custom_call.1
$region0: #{tpu_custom_call.1}
  #allocation0 [shape = 'u32[]', space=smem, size = 0x4, offset = 0x4, fixed_abs, tag = 'smem constant byte address 0x4 - core index']
  #allocation1 [shape = 'u32[144,128]{1,0:T(1,128)}', space=vmem, size = 0x12000, scoped, tag = 'internal scratch']
  %s0 = inlined_call_operand.vmem [shape: f32[4,256], index: 0, kind: input, shape index: {}]
  %s1 = inlined_call_operand.vmem [shape: f32[4,256], index: 1, kind: input, shape index: {}]
  %s2 = inlined_call_operand.vmem [shape: f32[48,4], index: 2, kind: input, shape index: {}]
  %s3 = inlined_call_operand.vmem [shape: f32[104,48], index: 3, kind: input, shape index: {}]
  %s4 = inlined_call_operand.vmem [shape: f32[152,1], index: 4, kind: input, shape index: {}]
  %s5 = inlined_call_operand.hbm [shape: f32[4,256], index: 5, kind: output, shape index: {0}]
  %s6 = inlined_call_operand.hbm [shape: f32[1,256], index: 6, kind: output, shape index: {1}]
  %7 = xla_tuple %s5, %s6
  %s8 = sld [smem:[#allocation0]]
  $region61: #{tpu_custom_call.1} parent=0
    _
  %s10 = ssub.s32 1, %s8
  %s11 = scalar_select 0, %s10, %s8
  $region1: #{tpu_custom_call.1} parent=0
    #allocation2 [shape = 'u8[4096]{0}', space=vmem, size = 0x1000, scoped, tag = 'output window, operand 0']
    #allocation3 [shape = 's32[2]{0}', space=sflag, size = 0x8, scoped, tag = 'scoped memory for tpu_custom_call.1']
    #allocation4 [shape = 'u8[1024]{0}', space=vmem, size = 0x400, scoped, tag = 'output window, operand 1']
    #allocation5 [shape = 's32[2]{0}', space=sflag, size = 0x8, scoped, tag = 'scoped memory for tpu_custom_call.1']
    %12 = vsyncpa [#allocation3], 0
    %s13 = scalar_lea.sflag [#allocation3], 1
    %14 = vsyncpa %s13, 0
    %15 = vsyncpa [#allocation5], 0
    %s16 = scalar_lea.sflag [#allocation5], 1
    %17 = vsyncpa %s16, 0
    loop: start=0, step=1, limit=4
    $region2: #{tpu_custom_call.1} parent=1 // loop_pre_header
      _
    $region3: #{tpu_custom_call.1} parent=1 // loop_header
      %s19 = sphi 0, %s23
      %p20 = scmp.ge.s32.totalorder %s19, 4
      %s29 = sphi 0, %s31
      %s32 = sphi 0, %s29
      %s33 = sphi 0, %s32
      %s49 = sphi 0, %s33
      %s55 = sphi 0, %s57
      %s58 = sphi 0, %s55
      %s59 = sphi 0, %s58
      %s75 = sphi 0, %s59
      %s79 = sphi 0, %s79
      %s81 = sphi 0, %s79
      %s82 = sphi 0, %s81
      %s96 = sphi 0, %s82
      %s100 = sphi 0, %s100
      %s102 = sphi 0, %s100
      %s103 = sphi 0, %s102
      %s117 = sphi 0, %s103
      %s121 = sphi 0, %s121
      %s123 = sphi 0, %s121
      %s124 = sphi 0, %s123
      %s138 = sphi 0, %s124
      %s144 = sphi 0, %s146
      %s147 = sphi 0, %s144
      %s148 = sphi 0, %s147
      %s164 = sphi 0, %s148
      %s170 = sphi 0, %s172
      %s173 = sphi 0, %s170
      %s174 = sphi 0, %s173
      %s190 = sphi 0, %s174
    $region4: #{tpu_custom_call.1} parent=1 // loop_header_branch
      %22 = sbr.rel (%p20) target = $region8
    $region5: #{tpu_custom_call.1} parent=1 // loop_body
      %s24 = ssub.s32 %s19, 1
      %s25 = ssub.s32 %s19, 2
      %s26 = sadd.s32 %s19, 1
      %s27 = ssub.s32 %s19, %s26
      %p28 = scmp.eq.s32.totalorder %s27, 0
      %s30 = sadd.s32 %s29, 1
      %s31 = scalar_select %p28, %s29, %s30
      %p34 = pneg %p28
      %p35 = scmp.eq.s32.totalorder %s19, 1
      %p36 = por %p34, %p35
      %p37 = scmp.ne.s32.totalorder %s29, %s32
      %p38 = scmp.eq.s32.totalorder %s19, 0
      %p39 = por %p37, %p38
      %p40 = scmp.ne.s32.totalorder %s29, %s32
      %p41 = scmp.eq.s32.totalorder %s24, 1
      %p42 = por %p40, %p41
      %p43 = scmp.ne.s32.totalorder %s32, %s33
      %p44 = scmp.eq.s32.totalorder %s24, 0
      %p45 = por %p43, %p44
      %p46 = scmp.ne.s32.totalorder %s32, %s33
      %p47 = scmp.eq.s32.totalorder %s25, 1
      %p48 = por %p46, %p47
      %p50 = scmp.ne.s32.totalorder %s33, %s49
      %p51 = scmp.eq.s32.totalorder %s25, 0
      %p52 = por %p50, %p51
      %s53 = ssub.s32 %s19, %s26
      %p54 = scmp.eq.s32.totalorder %s53, 0
      %s56 = sadd.s32 %s55, 1
      %s57 = scalar_select %p54, %s55, %s56
      %p60 = pneg %p54
      %p61 = scmp.eq.s32.totalorder %s19, 1
      %p62 = por %p60, %p61
      %p63 = scmp.ne.s32.totalorder %s55, %s58
      %p64 = scmp.eq.s32.totalorder %s19, 0
      %p65 = por %p63, %p64
      %p66 = scmp.ne.s32.totalorder %s55, %s58
      %p67 = scmp.eq.s32.totalorder %s24, 1
      %p68 = por %p66, %p67
      %p69 = scmp.ne.s32.totalorder %s58, %s59
      %p70 = scmp.eq.s32.totalorder %s24, 0
      %p71 = por %p69, %p70
      %p72 = scmp.ne.s32.totalorder %s58, %s59
      %p73 = scmp.eq.s32.totalorder %s25, 1
      %p74 = por %p72, %p73
      %p76 = scmp.ne.s32.totalorder %s59, %s75
      %p77 = scmp.eq.s32.totalorder %s25, 0
      %p78 = por %p76, %p77
      %s80 = sadd.s32 %s79, 1
      %p83 = scmp.eq.s32.totalorder %s19, 1
      %p84 = scmp.ne.s32.totalorder %s79, %s81
      %p85 = scmp.eq.s32.totalorder %s19, 0
      %p86 = por %p84, %p85
      %p87 = scmp.ne.s32.totalorder %s79, %s81
      %p88 = scmp.eq.s32.totalorder %s24, 1
      %p89 = por %p87, %p88
      %p90 = scmp.ne.s32.totalorder %s81, %s82
      %p91 = scmp.eq.s32.totalorder %s24, 0
      %p92 = por %p90, %p91
      %p93 = scmp.ne.s32.totalorder %s81, %s82
      %p94 = scmp.eq.s32.totalorder %s25, 1
      %p95 = por %p93, %p94
      %p97 = scmp.ne.s32.totalorder %s82, %s96
      %p98 = scmp.eq.s32.totalorder %s25, 0
      %p99 = por %p97, %p98
      %s101 = sadd.s32 %s100, 1
      %p104 = scmp.eq.s32.totalorder %s19, 1
      %p105 = scmp.ne.s32.totalorder %s100, %s102
      %p106 = scmp.eq.s32.totalorder %s19, 0
      %p107 = por %p105, %p106
      %p108 = scmp.ne.s32.totalorder %s100, %s102
      %p109 = scmp.eq.s32.totalorder %s24, 1
      %p110 = por %p108, %p109
      %p111 = scmp.ne.s32.totalorder %s102, %s103
      %p112 = scmp.eq.s32.totalorder %s24, 0
      %p113 = por %p111, %p112
      %p114 = scmp.ne.s32.totalorder %s102, %s103
      %p115 = scmp.eq.s32.totalorder %s25, 1
      %p116 = por %p114, %p115
      %p118 = scmp.ne.s32.totalorder %s103, %s117
      %p119 = scmp.eq.s32.totalorder %s25, 0
      %p120 = por %p118, %p119
      %s122 = sadd.s32 %s121, 1
      %p125 = scmp.eq.s32.totalorder %s19, 1
      %p126 = scmp.ne.s32.totalorder %s121, %s123
      %p127 = scmp.eq.s32.totalorder %s19, 0
      %p128 = por %p126, %p127
      %p129 = scmp.ne.s32.totalorder %s121, %s123
      %p130 = scmp.eq.s32.totalorder %s24, 1
      %p131 = por %p129, %p130
      %p132 = scmp.ne.s32.totalorder %s123, %s124
      %p133 = scmp.eq.s32.totalorder %s24, 0
      %p134 = por %p132, %p133
      %p135 = scmp.ne.s32.totalorder %s123, %s124
      %p136 = scmp.eq.s32.totalorder %s25, 1
      %p137 = por %p135, %p136
      %p139 = scmp.ne.s32.totalorder %s124, %s138
      %p140 = scmp.eq.s32.totalorder %s25, 0
      %p141 = por %p139, %p140
      %s142 = ssub.s32 %s19, %s26
      %p143 = scmp.eq.s32.totalorder %s142, 0
      %s145 = sadd.s32 %s144, 1
      %s146 = scalar_select %p143, %s144, %s145
      %p149 = pneg %p143
      %p150 = scmp.eq.s32.totalorder %s19, 1
      %p151 = por %p149, %p150
      %p152 = scmp.ne.s32.totalorder %s144, %s147
      %p153 = scmp.eq.s32.totalorder %s19, 0
      %p154 = por %p152, %p153
      %p155 = scmp.ne.s32.totalorder %s144, %s147
      %p156 = scmp.eq.s32.totalorder %s24, 1
      %p157 = por %p155, %p156
      %p158 = scmp.ne.s32.totalorder %s147, %s148
      %p159 = scmp.eq.s32.totalorder %s24, 0
      %p160 = por %p158, %p159
      %p161 = scmp.ne.s32.totalorder %s147, %s148
      %p162 = scmp.eq.s32.totalorder %s25, 1
      %p163 = por %p161, %p162
      %p165 = scmp.ne.s32.totalorder %s148, %s164
      %p166 = scmp.eq.s32.totalorder %s25, 0
      %p167 = por %p165, %p166
      %s168 = ssub.s32 %s19, %s26
      %p169 = scmp.eq.s32.totalorder %s168, 0
      %s171 = sadd.s32 %s170, 1
      %s172 = scalar_select %p169, %s170, %s171
      %p175 = pneg %p169
      %p176 = scmp.eq.s32.totalorder %s19, 1
      %p177 = por %p175, %p176
      %p178 = scmp.ne.s32.totalorder %s170, %s173
      %p179 = scmp.eq.s32.totalorder %s19, 0
      %p180 = por %p178, %p179
      %p181 = scmp.ne.s32.totalorder %s170, %s173
      %p182 = scmp.eq.s32.totalorder %s24, 1
      %p183 = por %p181, %p182
      %p184 = scmp.ne.s32.totalorder %s173, %s174
      %p185 = scmp.eq.s32.totalorder %s24, 0
      %p186 = por %p184, %p185
      %p187 = scmp.ne.s32.totalorder %s173, %s174
      %p188 = scmp.eq.s32.totalorder %s25, 1
      %p189 = por %p187, %p188
      %p191 = scmp.ne.s32.totalorder %s174, %s190
      %p192 = scmp.eq.s32.totalorder %s25, 0
      %p193 = por %p191, %p192
      %p194 = scmp.le.s32.totalorder 1, %s19
      %p195 = scmp.lt.s32.totalorder %s19, 3
      %p196 = pnand %p194, %p195
      %p197 = pneg %p196
      // Predicated region
      $region9: #{tpu_custom_call.1} parent=5 // pred_check
        _
      $region10: #{tpu_custom_call.1} parent=5 // pred_check_branch
        %199 = sbr.rel (%p196) target = $region12
      $region11: #{tpu_custom_call.1} parent=5 // pred_region
        %s200 = ssub.s32 %s19, 1
        // Predicated region
        $region13: #{tpu_custom_call.1} parent=11 // pred_check
          %p201 = pneg %p92
        $region14: #{tpu_custom_call.1} parent=11 // pred_check_branch
          %203 = sbr.rel (%p201) target = $region16
        $region15: #{tpu_custom_call.1} parent=11 // pred_region
          _
        $region16: #{tpu_custom_call.1} parent=11 // pred_fallthru
          _
        // Predicated region
        $region17: #{tpu_custom_call.1} parent=11 // pred_check
          %p204 = pneg %p113
        $region18: #{tpu_custom_call.1} parent=11 // pred_check_branch
          %206 = sbr.rel (%p204) target = $region20
        $region19: #{tpu_custom_call.1} parent=11 // pred_region
          _
        $region20: #{tpu_custom_call.1} parent=11 // pred_fallthru
          _
        // Predicated region
        $region21: #{tpu_custom_call.1} parent=11 // pred_check
          %p207 = pneg %p134
        $region22: #{tpu_custom_call.1} parent=11 // pred_check_branch
          %209 = sbr.rel (%p207) target = $region24
        $region23: #{tpu_custom_call.1} parent=11 // pred_region
          _
        $region24: #{tpu_custom_call.1} parent=11 // pred_fallthru
          _
      $region12: #{tpu_custom_call.1} parent=5 // pred_fallthru
        _
      %p210 = scmp.lt.s32.totalorder %s19, 2
      // Predicated region
      $region25: #{tpu_custom_call.1} parent=5 // pred_check
        %p211 = pneg %p210
      $region26: #{tpu_custom_call.1} parent=5 // pred_check_branch
        %213 = sbr.rel (%p211) target = $region28
      $region27: #{tpu_custom_call.1} parent=5 // pred_region
        // Predicated region
        $region29: #{tpu_custom_call.1} parent=27 // pred_check
          %p214 = pneg %p39
        $region30: #{tpu_custom_call.1} parent=27 // pred_check_branch
          %216 = sbr.rel (%p214) target = $region32
        $region31: #{tpu_custom_call.1} parent=27 // pred_region
          %p217 = scmp.lt.s32.totalorder %s19, 1
          %s218 = scalar_select %p217, %s19, 1
          %s219 = smul.addr %s218, 4
          %s220 = scalar_lea.vmem %s0, %s219
        $region32: #{tpu_custom_call.1} parent=27 // pred_fallthru
          _
        // Predicated region
        $region33: #{tpu_custom_call.1} parent=27 // pred_check
          %p221 = pneg %p65
        $region34: #{tpu_custom_call.1} parent=27 // pred_check_branch
          %223 = sbr.rel (%p221) target = $region36
        $region35: #{tpu_custom_call.1} parent=27 // pred_region
          %p224 = scmp.lt.s32.totalorder %s19, 1
          %s225 = scalar_select %p224, %s19, 1
          %s226 = smul.addr %s225, 4
          %s227 = scalar_lea.vmem %s1, %s226
        $region36: #{tpu_custom_call.1} parent=27 // pred_fallthru
          _
      $region28: #{tpu_custom_call.1} parent=5 // pred_fallthru
        _
      %p228 = scmp.le.s32.totalorder 1, %s19
      %p229 = scmp.lt.s32.totalorder %s19, 3
      %p230 = pnand %p228, %p229
      %p231 = pneg %p230
      // Predicated region
      $region37: #{tpu_custom_call.1} parent=5 // pred_check
        _
      $region38: #{tpu_custom_call.1} parent=5 // pred_check_branch
        %233 = sbr.rel (%p230) target = $region40
      $region39: #{tpu_custom_call.1} parent=5 // pred_region
        %s234 = ssub.s32 %s19, 1
        %p235 = scmp.lt.s32.totalorder %s24, 1
        %s236 = scalar_select %p235, %s24, 1
        %s237 = smul.addr %s236, 4
        %s238 = scalar_lea.vmem %s0, %s237
        %p239 = pneg %p45
        %p240 = pneg %p42
        %p241 = scmp.lt.s32.totalorder %s24, 1
        %s242 = scalar_select %p241, %s24, 1
        %s243 = smul.addr %s242, 4
        %s244 = scalar_lea.vmem %s1, %s243
        %p245 = pneg %p71
        %p246 = pneg %p68
        %p247 = pneg %p92
        %p248 = pneg %p89
        %p249 = pneg %p113
        %p250 = pneg %p110
        %p251 = pneg %p134
        %p252 = pneg %p131
        %p253 = pneg %p160
        %p254 = pneg %p157
        %s255 = sand.u32 %s147, 1
        %s256 = scalar_lea.sflag [#allocation3], %s255
        %s257 = sand.u32 %s147, 1
        %s258 = smul.addr %s257, 4
        %s259 = scalar_lea.vmem [#allocation2], %s258
        %p260 = pneg %p186
        %p261 = pneg %p183
        %s262 = sand.u32 %s173, 1
        %s263 = scalar_lea.sflag [#allocation5], %s262
        %s264 = sand.u32 %s173, 1
        %s265 = scalar_lea.vmem [#allocation4], %s264
        %p266 = scmp.lt.s32.totalorder %s24, 1
        %s267 = scalar_select %p266, %s24, 1
        %s268 = smul.addr %s267, 4
        %s269 = scalar_lea.vmem %s0, %s268
        %p270 = scmp.lt.s32.totalorder %s24, 1
        %s271 = scalar_select %p270, %s24, 1
        %s272 = smul.addr %s271, 4
        %s273 = scalar_lea.vmem %s1, %s272
        %v274 = vld [vmem:[%s269] sm:$0xf]
        %v275 = vld [vmem:[%s273] sm:$0xf]
        %v276 = vld [vmem:[%s2] sm:$0xff]
        %v277 = vld [vmem:[%s2 + $0x8] sm:$0xff]
        %v278 = vld [vmem:[%s2 + $0x10] sm:$0xff]
        %v279 = vld [vmem:[%s2 + $0x18] sm:$0xff]
        %v280 = vld [vmem:[%s2 + $0x20] sm:$0xff]
        %v281 = vld [vmem:[%s2 + $0x28] sm:$0xff]
        %v282 = vld [vmem:[%s4] sm:$0xff]
        %v283 = vld [vmem:[%s4 + $0x8] sm:$0xff]
        %v284 = vld [vmem:[%s4 + $0x10] sm:$0xff]
        %v285 = vld [vmem:[%s4 + $0x18] sm:$0xff]
        %v286 = vld [vmem:[%s4 + $0x20] sm:$0xff]
        %v287 = vld [vmem:[%s4 + $0x28] sm:$0xff]
        %289 = vset.pattern.permute.xlu0 0
        %290 = vperm.xlu0 %289, %v282
        %v291 = vpop.permute.xlu0 %290
        %294 = vset.pattern.permute.xlu0 0
        %295 = vperm.xlu0 %294, %v283
        %v296 = vpop.permute.xlu0 %295
        %299 = vset.pattern.permute.xlu0 0
        %300 = vperm.xlu0 %299, %v284
        %v301 = vpop.permute.xlu0 %300
        %304 = vset.pattern.permute.xlu0 0
        %305 = vperm.xlu0 %304, %v285
        %v306 = vpop.permute.xlu0 %305
        %309 = vset.pattern.permute.xlu0 0
        %310 = vperm.xlu0 %309, %v286
        %v311 = vpop.permute.xlu0 %310
        %314 = vset.pattern.permute.xlu0 0
        %315 = vperm.xlu0 %314, %v287
        %v316 = vpop.permute.xlu0 %315
        %vm318 = vcmask 31744
        %v320 = vsel %vm318, %v276, 0
        %v323 = vsel %vm318, %v277, 0
        %v326 = vsel %vm318, %v278, 0
        %v329 = vsel %vm318, %v279, 0
        %v332 = vsel %vm318, %v280, 0
        %v335 = vsel %vm318, %v281, 0
        %vm337 = vcmask 1043456
        %v339 = vsel %vm337, %v274, 0
        %341 = vmatprep.subr.mxu0 0.0
        %342 = vmatpush1.msra.mxu0 %v339
        %343 = vmatprep.subr.mxu0 0.0
        %344 = vmatpush1.msra.mxu0 0.0
        %345 = vmatprep.subr.mxu0 0.0
        %346 = vmatpush1.msra.mxu0 0.0
        %347 = vmatprep.subr.mxu0 0.0
        %348 = vmatpush1.msra.mxu0 0.0
        %349 = vmatprep.subr.mxu0 0.0
        %350 = vmatpush1.msra.mxu0 0.0
        %351 = vmatprep.subr.mxu0 0.0
        %352 = vmatpush1.msra.mxu0 0.0
        %353 = vmatprep.subr.mxu0 0.0
        %354 = vmatpush1.msra.mxu0 0.0
        %355 = vmatprep.subr.mxu0 0.0
        %356 = vmatpush1.msra.mxu0 0.0
        %357 = vmatprep.subr.mxu0 0.0
        %358 = vmatpush1.msra.mxu0 0.0
        %359 = vmatprep.subr.mxu0 0.0
        %360 = vmatpush1.msra.mxu0 0.0
        %361 = vmatprep.subr.mxu0 0.0
        %362 = vmatpush1.msra.mxu0 0.0
        %363 = vmatprep.subr.mxu0 0.0
        %364 = vmatpush1.msra.mxu0 0.0
        %365 = vmatprep.subr.mxu0 0.0
        %366 = vmatpush1.msra.mxu0 0.0
        %367 = vmatprep.subr.mxu0 0.0
        %368 = vmatpush1.msra.mxu0 0.0
        %369 = vmatprep.subr.mxu0 0.0
        %370 = vmatpush1.msra.mxu0 0.0
        %371 = vmatprep.subr.mxu0 0.0
        %372 = vmatpush1.msra.mxu0 0.0
        %373 = vmatprep.subr.mxu0 0.0
        %374 = vmatpush1.msra.mxu0 0.0
        %375 = vmatprep.subr.mxu0 0.0
        %376 = vmatpush1.msra.mxu0 0.0
        %377 = vmatprep.subr.mxu0 0.0
        %378 = vmatpush1.msra.mxu0 0.0
        %379 = vmatprep.subr.mxu0 0.0
        %380 = vmatpush1.msra.mxu0 0.0
        %381 = vmatprep.subr.mxu0 0.0
        %382 = vmatpush1.msra.mxu0 0.0
        %383 = vmatprep.subr.mxu0 0.0
        %384 = vmatpush1.msra.mxu0 0.0
        %385 = vmatprep.subr.mxu0 0.0
        %386 = vmatpush1.msra.mxu0 0.0
        %387 = vmatprep.subr.mxu0 0.0
        %388 = vmatpush1.msra.mxu0 0.0
        %389 = vmatprep.subr.mxu0 0.0
        %390 = vmatpush1.msra.mxu0 0.0
        %391 = vmatprep.subr.mxu0 0.0
        %392 = vmatpush1.msra.mxu0 0.0
        %393 = vmatprep.subr.mxu0 0.0
        %394 = vmatpush1.msra.mxu0 0.0
        %395 = vmatprep.subr.mxu0 0.0
        %396 = vmatpush1.msra.mxu0 0.0
        %397 = vmatprep.subr.mxu0 0.0
        %398 = vmatpush1.msra.mxu0 0.0
        %399 = vmatprep.subr.mxu0 0.0
        %400 = vmatpush1.msra.mxu0 0.0
        %401 = vmatprep.subr.mxu0 0.0
        %402 = vmatpush1.msra.mxu0 0.0
        %403 = vmatprep.subr.mxu0 0.0
        %404 = vmatpush1.msra.mxu0 0.0
        %405 = vmatprep.mubr.f32.mxu0 0.0
        %406 = vmatmul.mubr.f32.gmra.mrb[0].mxu0 %v320
        %v407 = vpop.f32.mrb[0].mxu0
        %v408 = vadd.f32 %v291, %v407
        %v409 = vpop.f32.mrb[0].mxu0
        %410 = vmatprep.mubr.f32.mxu0 0.0
        %411 = vmatmul.mubr.f32.gmra.mrb[0].mxu0 %v323
        %v412 = vpop.f32.mrb[0].mxu0
        %v413 = vadd.f32 %v296, %v412
        %v414 = vpop.f32.mrb[0].mxu0
        %415 = vmatprep.mubr.f32.mxu0 0.0
        %416 = vmatmul.mubr.f32.gmra.mrb[0].mxu0 %v326
        %v417 = vpop.f32.mrb[0].mxu0
        %v418 = vadd.f32 %v301, %v417
        %v419 = vpop.f32.mrb[0].mxu0
        %420 = vmatprep.mubr.f32.mxu0 0.0
        %421 = vmatmul.mubr.f32.gmra.mrb[0].mxu0 %v329
        %v422 = vpop.f32.mrb[0].mxu0
        %v423 = vadd.f32 %v306, %v422
        %v424 = vpop.f32.mrb[0].mxu0
        %425 = vmatprep.mubr.f32.mxu0 0.0
        %426 = vmatmul.mubr.f32.gmra.mrb[0].mxu0 %v332
        %v427 = vpop.f32.mrb[0].mxu0
        %v428 = vadd.f32 %v311, %v427
        %v429 = vpop.f32.mrb[0].mxu0
        %430 = vmatprep.mubr.f32.mxu0 0.0
        %431 = vmatmul.mubr.f32.gmra.mrb[0].mxu0 %v335
        %v432 = vpop.f32.mrb[0].mxu0
        %v433 = vadd.f32 %v316, %v432
        %v434 = vpop.f32.mrb[0].mxu0
        %435 = vdwg.mxu0
        %vm436 = vcmp.gt.f32.partialorder %v408, 0.0
        %vm437 = vcmp.gt.f32.partialorder %v413, 0.0
        %vm438 = vcmp.gt.f32.partialorder %v418, 0.0
        %vm439 = vcmp.gt.f32.partialorder %v423, 0.0
        %vm440 = vcmp.gt.f32.partialorder %v428, 0.0
        %vm441 = vcmp.gt.f32.partialorder %v433, 0.0
        %v442 = vmul.f32 %v408, 0.2
        %v443 = vmul.f32 %v413, 0.2
        %v444 = vmul.f32 %v418, 0.2
        %v445 = vmul.f32 %v423, 0.2
        %v446 = vmul.f32 %v428, 0.2
        %v447 = vmul.f32 %v433, 0.2
        %v448 = vsel %vm436, %v408, %v442
        %v449 = vsel %vm437, %v413, %v443
        %v450 = vsel %vm438, %v418, %v444
        %v451 = vsel %vm439, %v423, %v445
        %v452 = vsel %vm440, %v428, %v446
        %v453 = vsel %vm441, %v433, %v447
        %v454 = vld [vmem:[%s3] sm:$0xff]
        %v455 = vld [vmem:[%s3 + $0x8] sm:$0xff]
        %v456 = vld [vmem:[%s3 + $0x10] sm:$0xff]
        %v457 = vld [vmem:[%s3 + $0x18] sm:$0xff]
        %v458 = vld [vmem:[%s3 + $0x20] sm:$0xff]
        %v459 = vld [vmem:[%s3 + $0x28] sm:$0xff]
        %v460 = vld [vmem:[%s4 + $0x30] sm:$0xff]
        %v461 = vld [vmem:[%s4 + $0x38] sm:$0xff]
        %v462 = vld [vmem:[%s4 + $0x40] sm:$0xff]
        %v463 = vld [vmem:[%s4 + $0x48] sm:$0xff]
        %v464 = vld [vmem:[%s4 + $0x50] sm:$0xff]
        %v465 = vld [vmem:[%s4 + $0x58] sm:$0xff]
        %467 = vset.pattern.permute.xlu0 0
        %468 = vperm.xlu0 %467, %v460
        %v469 = vpop.permute.xlu0 %468
        %472 = vset.pattern.permute.xlu0 0
        %473 = vperm.xlu0 %472, %v461
        %v474 = vpop.permute.xlu0 %473
        %477 = vset.pattern.permute.xlu0 0
        %478 = vperm.xlu0 %477, %v462
        %v479 = vpop.permute.xlu0 %478
        %482 = vset.pattern.permute.xlu0 0
        %483 = vperm.xlu0 %482, %v463
        %v484 = vpop.permute.xlu0 %483
        %487 = vset.pattern.permute.xlu0 0
        %488 = vperm.xlu0 %487, %v464
        %v489 = vpop.permute.xlu0 %488
        %492 = vset.pattern.permute.xlu0 0
        %493 = vperm.xlu0 %492, %v465
        %v494 = vpop.permute.xlu0 %493
        %vm496 = vcmask 392192
        %v498 = vsel %vm496, %v454, 0
        %v501 = vsel %vm496, %v455, 0
        %v504 = vsel %vm496, %v456, 0
        %v507 = vsel %vm496, %v457, 0
        %v510 = vsel %vm496, %v458, 0
        %v513 = vsel %vm496, %v459, 0
        %515 = vmatprep.subr.mxu0 0.0
        %516 = vmatpush1.msra.mxu0 %v448
        %517 = vmatprep.subr.mxu0 0.0
        %518 = vmatpush1.msra.mxu0 %v449
        %519 = vmatprep.subr.mxu0 0.0
        %520 = vmatpush1.msra.mxu0 %v450
        %521 = vmatprep.subr.mxu0 0.0
        %522 = vmatpush1.msra.mxu0 %v451
        %523 = vmatprep.subr.mxu0 0.0
        %524 = vmatpush1.msra.mxu0 %v452
        %525 = vmatprep.subr.mxu0 0.0
        %526 = vmatpush1.msra.mxu0 %v453
        %527 = vmatprep.subr.mxu0 0.0
        %528 = vmatpush1.msra.mxu0 0.0
        %529 = vmatprep.subr.mxu0 0.0
        %530 = vmatpush1.msra.mxu0 0.0
        %531 = vmatprep.subr.mxu0 0.0
        %532 = vmatpush1.msra.mxu0 0.0
        %533 = vmatprep.subr.mxu0 0.0
        %534 = vmatpush1.msra.mxu0 0.0
        %535 = vmatprep.subr.mxu0 0.0
        %536 = vmatpush1.msra.mxu0 0.0
        %537 = vmatprep.subr.mxu0 0.0
        %538 = vmatpush1.msra.mxu0 0.0
        %539 = vmatprep.subr.mxu0 0.0
        %540 = vmatpush1.msra.mxu0 0.0
        %541 = vmatprep.subr.mxu0 0.0
        %542 = vmatpush1.msra.mxu0 0.0
        %543 = vmatprep.subr.mxu0 0.0
        %544 = vmatpush1.msra.mxu0 0.0
        %545 = vmatprep.subr.mxu0 0.0
        %546 = vmatpush1.msra.mxu0 0.0
        %547 = vmatprep.subr.mxu0 0.0
        %548 = vmatpush1.msra.mxu0 0.0
        %549 = vmatprep.subr.mxu0 0.0
        %550 = vmatpush1.msra.mxu0 0.0
        %551 = vmatprep.subr.mxu0 0.0
        %552 = vmatpush1.msra.mxu0 0.0
        %553 = vmatprep.subr.mxu0 0.0
        %554 = vmatpush1.msra.mxu0 0.0
        %555 = vmatprep.subr.mxu0 0.0
        %556 = vmatpush1.msra.mxu0 0.0
        %557 = vmatprep.subr.mxu0 0.0
        %558 = vmatpush1.msra.mxu0 0.0
        %559 = vmatprep.subr.mxu0 0.0
        %560 = vmatpush1.msra.mxu0 0.0
        %561 = vmatprep.subr.mxu0 0.0
        %562 = vmatpush1.msra.mxu0 0.0
        %563 = vmatprep.subr.mxu0 0.0
        %564 = vmatpush1.msra.mxu0 0.0
        %565 = vmatprep.subr.mxu0 0.0
        %566 = vmatpush1.msra.mxu0 0.0
        %567 = vmatprep.subr.mxu0 0.0
        %568 = vmatpush1.msra.mxu0 0.0
        %569 = vmatprep.subr.mxu0 0.0
        %570 = vmatpush1.msra.mxu0 0.0
        %571 = vmatprep.subr.mxu0 0.0
        %572 = vmatpush1.msra.mxu0 0.0
        %573 = vmatprep.subr.mxu0 0.0
        %574 = vmatpush1.msra.mxu0 0.0
        %575 = vmatprep.subr.mxu0 0.0
        %576 = vmatpush1.msra.mxu0 0.0
        %577 = vmatprep.subr.mxu0 0.0
        %578 = vmatpush1.msra.mxu0 0.0
        %579 = vmatprep.mubr.f32.mxu0 0.0
        %580 = vmatmul.mubr.f32.gmra.mrb[0].mxu0 %v498
        %v581 = vpop.f32.mrb[0].mxu0
        %v582 = vadd.f32 %v469, %v581
        %v583 = vpop.f32.mrb[0].mxu0
        %584 = vmatprep.mubr.f32.mxu0 0.0
        %585 = vmatmul.mubr.f32.gmra.mrb[0].mxu0 %v501
        %v586 = vpop.f32.mrb[0].mxu0
        %v587 = vadd.f32 %v474, %v586
        %v588 = vpop.f32.mrb[0].mxu0
        %589 = vmatprep.mubr.f32.mxu0 0.0
        %590 = vmatmul.mubr.f32.gmra.mrb[0].mxu0 %v504
        %v591 = vpop.f32.mrb[0].mxu0
        %v592 = vadd.f32 %v479, %v591
        %v593 = vpop.f32.mrb[0].mxu0
        %594 = vmatprep.mubr.f32.mxu0 0.0
        %595 = vmatmul.mubr.f32.gmra.mrb[0].mxu0 %v507
        %v596 = vpop.f32.mrb[0].mxu0
        %v597 = vadd.f32 %v484, %v596
        %v598 = vpop.f32.mrb[0].mxu0
        %599 = vmatprep.mubr.f32.mxu0 0.0
        %600 = vmatmul.mubr.f32.gmra.mrb[0].mxu0 %v510
        %v601 = vpop.f32.mrb[0].mxu0
        %v602 = vadd.f32 %v489, %v601
        %v603 = vpop.f32.mrb[0].mxu0
        %604 = vmatprep.mubr.f32.mxu0 0.0
        %605 = vmatmul.mubr.f32.gmra.mrb[0].mxu0 %v513
        %v606 = vpop.f32.mrb[0].mxu0
        %v607 = vadd.f32 %v494, %v606
        %v608 = vpop.f32.mrb[0].mxu0
        %609 = vdwg.mxu0
        %vm610 = vcmp.gt.f32.partialorder %v582, 0.0
        %vm611 = vcmp.gt.f32.partialorder %v587, 0.0
        %vm612 = vcmp.gt.f32.partialorder %v592, 0.0
        %vm613 = vcmp.gt.f32.partialorder %v597, 0.0
        %vm614 = vcmp.gt.f32.partialorder %v602, 0.0
        %vm615 = vcmp.gt.f32.partialorder %v607, 0.0
        %v616 = vmul.f32 %v582, 0.2
        %v617 = vmul.f32 %v587, 0.2
        %v618 = vmul.f32 %v592, 0.2
        %v619 = vmul.f32 %v597, 0.2
        %v620 = vmul.f32 %v602, 0.2
        %v621 = vmul.f32 %v607, 0.2
        %v622 = vsel %vm610, %v582, %v616
        %v623 = vsel %vm611, %v587, %v617
        %v624 = vsel %vm612, %v592, %v618
        %v625 = vsel %vm613, %v597, %v619
        %v626 = vsel %vm614, %v602, %v620
        %v627 = vsel %vm615, %v607, %v621
        %v628 = vld [vmem:[%s3 + $0x30] sm:$0xff]
        %v629 = vld [vmem:[%s3 + $0x38] sm:$0xff]
        %v630 = vld [vmem:[%s3 + $0x40] sm:$0xff]
        %v631 = vld [vmem:[%s3 + $0x48] sm:$0xff]
        %v632 = vld [vmem:[%s3 + $0x50] sm:$0xff]
        %v633 = vld [vmem:[%s3 + $0x58] sm:$0xff]
        %v634 = vld [vmem:[%s4 + $0x60] sm:$0xff]
        %v635 = vld [vmem:[%s4 + $0x68] sm:$0xff]
        %v636 = vld [vmem:[%s4 + $0x70] sm:$0xff]
        %v637 = vld [vmem:[%s4 + $0x78] sm:$0xff]
        %v638 = vld [vmem:[%s4 + $0x80] sm:$0xff]
        %v639 = vld [vmem:[%s4 + $0x88] sm:$0xff]
        %641 = vset.pattern.permute.xlu0 0
        %642 = vperm.xlu0 %641, %v634
        %v643 = vpop.permute.xlu0 %642
        %646 = vset.pattern.permute.xlu0 0
        %647 = vperm.xlu0 %646, %v635
        %v648 = vpop.permute.xlu0 %647
        %651 = vset.pattern.permute.xlu0 0
        %652 = vperm.xlu0 %651, %v636
        %v653 = vpop.permute.xlu0 %652
        %656 = vset.pattern.permute.xlu0 0
        %657 = vperm.xlu0 %656, %v637
        %v658 = vpop.permute.xlu0 %657
        %661 = vset.pattern.permute.xlu0 0
        %662 = vperm.xlu0 %661, %v638
        %v663 = vpop.permute.xlu0 %662
        %666 = vset.pattern.permute.xlu0 0
        %667 = vperm.xlu0 %666, %v639
        %v668 = vpop.permute.xlu0 %667
        %v671 = vsel %vm496, %v628, 0
        %v674 = vsel %vm496, %v629, 0
        %v677 = vsel %vm496, %v630, 0
        %v680 = vsel %vm496, %v631, 0
        %v683 = vsel %vm496, %v632, 0
        %v686 = vsel %vm496, %v633, 0
        %688 = vmatprep.subr.mxu0 0.0
        %689 = vmatpush1.msra.mxu0 %v622
        %690 = vmatprep.subr.mxu0 0.0
        %691 = vmatpush1.msra.mxu0 %v623
        %692 = vmatprep.subr.mxu0 0.0
        %693 = vmatpush1.msra.mxu0 %v624
        %694 = vmatprep.subr.mxu0 0.0
        %695 = vmatpush1.msra.mxu0 %v625
        %696 = vmatprep.subr.mxu0 0.0
        %697 = vmatpush1.msra.mxu0 %v626
        %698 = vmatprep.subr.mxu0 0.0
        %699 = vmatpush1.msra.mxu0 %v627
        %700 = vmatprep.subr.mxu0 0.0
        %701 = vmatpush1.msra.mxu0 0.0
        %702 = vmatprep.subr.mxu0 0.0
        %703 = vmatpush1.msra.mxu0 0.0
        %704 = vmatprep.subr.mxu0 0.0
        %705 = vmatpush1.msra.mxu0 0.0
        %706 = vmatprep.subr.mxu0 0.0
        %707 = vmatpush1.msra.mxu0 0.0
        %708 = vmatprep.subr.mxu0 0.0
        %709 = vmatpush1.msra.mxu0 0.0
        %710 = vmatprep.subr.mxu0 0.0
        %711 = vmatpush1.msra.mxu0 0.0
        %712 = vmatprep.subr.mxu0 0.0
        %713 = vmatpush1.msra.mxu0 0.0
        %714 = vmatprep.subr.mxu0 0.0
        %715 = vmatpush1.msra.mxu0 0.0
        %716 = vmatprep.subr.mxu0 0.0
        %717 = vmatpush1.msra.mxu0 0.0
        %718 = vmatprep.subr.mxu0 0.0
        %719 = vmatpush1.msra.mxu0 0.0
        %720 = vmatprep.subr.mxu0 0.0
        %721 = vmatpush1.msra.mxu0 0.0
        %722 = vmatprep.subr.mxu0 0.0
        %723 = vmatpush1.msra.mxu0 0.0
        %724 = vmatprep.subr.mxu0 0.0
        %725 = vmatpush1.msra.mxu0 0.0
        %726 = vmatprep.subr.mxu0 0.0
        %727 = vmatpush1.msra.mxu0 0.0
        %728 = vmatprep.subr.mxu0 0.0
        %729 = vmatpush1.msra.mxu0 0.0
        %730 = vmatprep.subr.mxu0 0.0
        %731 = vmatpush1.msra.mxu0 0.0
        %732 = vmatprep.subr.mxu0 0.0
        %733 = vmatpush1.msra.mxu0 0.0
        %734 = vmatprep.subr.mxu0 0.0
        %735 = vmatpush1.msra.mxu0 0.0
        %736 = vmatprep.subr.mxu0 0.0
        %737 = vmatpush1.msra.mxu0 0.0
        %738 = vmatprep.subr.mxu0 0.0
        %739 = vmatpush1.msra.mxu0 0.0
        %740 = vmatprep.subr.mxu0 0.0
        %741 = vmatpush1.msra.mxu0 0.0
        %742 = vmatprep.subr.mxu0 0.0
        %743 = vmatpush1.msra.mxu0 0.0
        %744 = vmatprep.subr.mxu0 0.0
        %745 = vmatpush1.msra.mxu0 0.0
        %746 = vmatprep.subr.mxu0 0.0
        %747 = vmatpush1.msra.mxu0 0.0
        %748 = vmatprep.subr.mxu0 0.0
        %749 = vmatpush1.msra.mxu0 0.0
        %750 = vmatprep.subr.mxu0 0.0
        %751 = vmatpush1.msra.mxu0 0.0
        %752 = vmatprep.mubr.f32.mxu0 0.0
        %753 = vmatmul.mubr.f32.gmra.mrb[0].mxu0 %v671
        %v754 = vpop.f32.mrb[0].mxu0
        %v755 = vadd.f32 %v643, %v754
        %v756 = vpop.f32.mrb[0].mxu0
        %757 = vmatprep.mubr.f32.mxu0 0.0
        %758 = vmatmul.mubr.f32.gmra.mrb[0].mxu0 %v674
        %v759 = vpop.f32.mrb[0].mxu0
        %v760 = vadd.f32 %v648, %v759
        %v761 = vpop.f32.mrb[0].mxu0
        %762 = vmatprep.mubr.f32.mxu0 0.0
        %763 = vmatmul.mubr.f32.gmra.mrb[0].mxu0 %v677
        %v764 = vpop.f32.mrb[0].mxu0
        %v765 = vadd.f32 %v653, %v764
        %v766 = vpop.f32.mrb[0].mxu0
        %767 = vmatprep.mubr.f32.mxu0 0.0
        %768 = vmatmul.mubr.f32.gmra.mrb[0].mxu0 %v680
        %v769 = vpop.f32.mrb[0].mxu0
        %v770 = vadd.f32 %v658, %v769
        %v771 = vpop.f32.mrb[0].mxu0
        %772 = vmatprep.mubr.f32.mxu0 0.0
        %773 = vmatmul.mubr.f32.gmra.mrb[0].mxu0 %v683
        %v774 = vpop.f32.mrb[0].mxu0
        %v775 = vadd.f32 %v663, %v774
        %v776 = vpop.f32.mrb[0].mxu0
        %777 = vmatprep.mubr.f32.mxu0 0.0
        %778 = vmatmul.mubr.f32.gmra.mrb[0].mxu0 %v686
        %v779 = vpop.f32.mrb[0].mxu0
        %v780 = vadd.f32 %v668, %v779
        %v781 = vpop.f32.mrb[0].mxu0
        %782 = vdwg.mxu0
        %vm783 = vcmp.gt.f32.partialorder %v755, 0.0
        %vm784 = vcmp.gt.f32.partialorder %v760, 0.0
        %vm785 = vcmp.gt.f32.partialorder %v765, 0.0
        %vm786 = vcmp.gt.f32.partialorder %v770, 0.0
        %vm787 = vcmp.gt.f32.partialorder %v775, 0.0
        %vm788 = vcmp.gt.f32.partialorder %v780, 0.0
        %v789 = vmul.f32 %v755, 0.2
        %v790 = vmul.f32 %v760, 0.2
        %v791 = vmul.f32 %v765, 0.2
        %v792 = vmul.f32 %v770, 0.2
        %v793 = vmul.f32 %v775, 0.2
        %v794 = vmul.f32 %v780, 0.2
        %v795 = vsel %vm783, %v755, %v789
        %v796 = vsel %vm784, %v760, %v790
        %v797 = vsel %vm785, %v765, %v791
        %v798 = vsel %vm786, %v770, %v792
        %v799 = vsel %vm787, %v775, %v793
        %v800 = vsel %vm788, %v780, %v794
        %v801 = vld [vmem:[%s3 + $0x60] sm:$0xff]
        %v802 = vld [vmem:[%s4 + $0x90] sm:$0xff]
        %804 = vset.pattern.permute.xlu0 0
        %805 = vperm.xlu0 %804, %v802
        %v806 = vpop.permute.xlu0 %805
        %v809 = vsel %vm496, %v801, 0
        %811 = vmatprep.subr.mxu0 0.0
        %812 = vmatpush1.msra.mxu0 %v795
        %813 = vmatprep.subr.mxu0 0.0
        %814 = vmatpush1.msra.mxu0 %v796
        %815 = vmatprep.subr.mxu0 0.0
        %816 = vmatpush1.msra.mxu0 %v797
        %817 = vmatprep.subr.mxu0 0.0
        %818 = vmatpush1.msra.mxu0 %v798
        %819 = vmatprep.subr.mxu0 0.0
        %820 = vmatpush1.msra.mxu0 %v799
        %821 = vmatprep.subr.mxu0 0.0
        %822 = vmatpush1.msra.mxu0 %v800
        %823 = vmatprep.subr.mxu0 0.0
        %824 = vmatpush1.msra.mxu0 0.0
        %825 = vmatprep.subr.mxu0 0.0
        %826 = vmatpush1.msra.mxu0 0.0
        %827 = vmatprep.subr.mxu0 0.0
        %828 = vmatpush1.msra.mxu0 0.0
        %829 = vmatprep.subr.mxu0 0.0
        %830 = vmatpush1.msra.mxu0 0.0
        %831 = vmatprep.subr.mxu0 0.0
        %832 = vmatpush1.msra.mxu0 0.0
        %833 = vmatprep.subr.mxu0 0.0
        %834 = vmatpush1.msra.mxu0 0.0
        %835 = vmatprep.subr.mxu0 0.0
        %836 = vmatpush1.msra.mxu0 0.0
        %837 = vmatprep.subr.mxu0 0.0
        %838 = vmatpush1.msra.mxu0 0.0
        %839 = vmatprep.subr.mxu0 0.0
        %840 = vmatpush1.msra.mxu0 0.0
        %841 = vmatprep.subr.mxu0 0.0
        %842 = vmatpush1.msra.mxu0 0.0
        %843 = vmatprep.subr.mxu0 0.0
        %844 = vmatpush1.msra.mxu0 0.0
        %845 = vmatprep.subr.mxu0 0.0
        %846 = vmatpush1.msra.mxu0 0.0
        %847 = vmatprep.subr.mxu0 0.0
        %848 = vmatpush1.msra.mxu0 0.0
        %849 = vmatprep.subr.mxu0 0.0
        %850 = vmatpush1.msra.mxu0 0.0
        %851 = vmatprep.subr.mxu0 0.0
        %852 = vmatpush1.msra.mxu0 0.0
        %853 = vmatprep.subr.mxu0 0.0
        %854 = vmatpush1.msra.mxu0 0.0
        %855 = vmatprep.subr.mxu0 0.0
        %856 = vmatpush1.msra.mxu0 0.0
        %857 = vmatprep.subr.mxu0 0.0
        %858 = vmatpush1.msra.mxu0 0.0
        %859 = vmatprep.subr.mxu0 0.0
        %860 = vmatpush1.msra.mxu0 0.0
        %861 = vmatprep.subr.mxu0 0.0
        %862 = vmatpush1.msra.mxu0 0.0
        %863 = vmatprep.subr.mxu0 0.0
        %864 = vmatpush1.msra.mxu0 0.0
        %865 = vmatprep.subr.mxu0 0.0
        %866 = vmatpush1.msra.mxu0 0.0
        %867 = vmatprep.subr.mxu0 0.0
        %868 = vmatpush1.msra.mxu0 0.0
        %869 = vmatprep.subr.mxu0 0.0
        %870 = vmatpush1.msra.mxu0 0.0
        %871 = vmatprep.subr.mxu0 0.0
        %872 = vmatpush1.msra.mxu0 0.0
        %873 = vmatprep.subr.mxu0 0.0
        %874 = vmatpush1.msra.mxu0 0.0
        %875 = vmatprep.mubr.f32.mxu0 0.0
        %876 = vmatmul.mubr.f32.gmra.mrb[0].mxu0 %v809
        %v877 = vpop.f32.mrb[0].mxu0
        %v878 = vadd.f32 %v806, %v877
        %v879 = vpop.f32.mrb[0].mxu0
        %880 = vdwg.mxu0
        %v881 = vmul.f32 %v878, 1.442695
        %v882 = vpow.pop %v881
        %v883 = vmul.f32 %v882, %v275
        %v885 = vrot.slane %v878, 4
        %v887 = vadd.f32 %v883, %v885
        %888 = vst [vmem:[%s259] sm:$0xf] %v887
        %v889 = vsel %vm337, %v878, 0.0
        %v890 = vrot.slane %v889, 4
        %v891 = vadd.f32 %v889, %v890
        %v892 = vrot.slane %v891, 2
        %v893 = vadd.f32 %v891, %v892
        %v894 = vrot.slane %v893, 1
        %v895 = vadd.f32 %v893, %v894
        %896 = vst [vmem:[%s265] sm:$0x1] %v895
        %s897 = sand.u32 %s147, 1
        %s898 = scalar_lea.sflag [#allocation3], %s897
        %s899 = sand.u32 %s147, 1
        %s900 = smul.addr %s899, 4
        %s901 = scalar_lea.vmem [#allocation2], %s900
        %s902 = sand.u32 %s173, 1
        %s903 = scalar_lea.sflag [#allocation5], %s902
        %s904 = sand.u32 %s173, 1
        %s905 = scalar_lea.vmem [#allocation4], %s904
        // Predicated region
        $region41: #{tpu_custom_call.1} parent=39 // pred_check
          %p906 = pneg %p157
        $region42: #{tpu_custom_call.1} parent=39 // pred_check_branch
          %908 = sbr.rel (%p906) target = $region44
        $region43: #{tpu_custom_call.1} parent=39 // pred_region
          %s910 = ssub.s32 64, 64
          %911 = vsyncadd %s898, %s910
          %s912 = smul.addr %s24, 64
          %s913 = scalar_lea.hbm %s5, %s912
          %s915 = sshll.u32 %s901, 4
          %s916 = int_to_ptr.vmem [resolvable:$true] %s915
          %918 = dma.vmem_to_hbm [thread:$0]  %s916, 64, %s913, %s898
        $region44: #{tpu_custom_call.1} parent=39 // pred_fallthru
          _
        // Predicated region
        $region45: #{tpu_custom_call.1} parent=39 // pred_check
          %p919 = pneg %p183
        $region46: #{tpu_custom_call.1} parent=39 // pred_check_branch
          %921 = sbr.rel (%p919) target = $region48
        $region47: #{tpu_custom_call.1} parent=39 // pred_region
          %s923 = ssub.s32 16, 16
          %924 = vsyncadd %s903, %s923
          %s925 = smul.addr %s24, 16
          %s926 = scalar_lea.hbm %s6, %s925
          %s928 = sshll.u32 %s905, 4
          %s929 = int_to_ptr.vmem [resolvable:$true] %s928
          %931 = dma.vmem_to_hbm [thread:$0]  %s929, 16, %s926, %s903
        $region48: #{tpu_custom_call.1} parent=39 // pred_fallthru
          _
      $region40: #{tpu_custom_call.1} parent=5 // pred_fallthru
        _
      %p932 = scmp.le.s32.totalorder 2, %s19
      // Predicated region
      $region49: #{tpu_custom_call.1} parent=5 // pred_check
        %p933 = pneg %p932
      $region50: #{tpu_custom_call.1} parent=5 // pred_check_branch
        %935 = sbr.rel (%p933) target = $region52
      $region51: #{tpu_custom_call.1} parent=5 // pred_region
        %s936 = ssub.s32 %s19, 2
        // Predicated region
        $region53: #{tpu_custom_call.1} parent=51 // pred_check
          %p937 = pneg %p163
        $region54: #{tpu_custom_call.1} parent=51 // pred_check_branch
          %939 = sbr.rel (%p937) target = $region56
        $region55: #{tpu_custom_call.1} parent=51 // pred_region
          %s940 = sand.u32 %s148, 1
          %s941 = scalar_lea.sflag [#allocation3], %s940
          %s942 = sand.u32 %s148, 1
          %s943 = smul.addr %s942, 4
          %s944 = scalar_lea.vmem [#allocation2], %s943
          %945 = dma.done %s941, 64
        $region56: #{tpu_custom_call.1} parent=51 // pred_fallthru
          _
        // Predicated region
        $region57: #{tpu_custom_call.1} parent=51 // pred_check
          %p946 = pneg %p189
        $region58: #{tpu_custom_call.1} parent=51 // pred_check_branch
          %948 = sbr.rel (%p946) target = $region60
        $region59: #{tpu_custom_call.1} parent=51 // pred_region
          %s949 = sand.u32 %s174, 1
          %s950 = scalar_lea.sflag [#allocation5], %s949
          %s951 = sand.u32 %s174, 1
          %s952 = scalar_lea.vmem [#allocation4], %s951
          %953 = dma.done %s950, 16
        $region60: #{tpu_custom_call.1} parent=51 // pred_fallthru
          _
      $region52: #{tpu_custom_call.1} parent=5 // pred_fallthru
        _
    $region6: #{tpu_custom_call.1} parent=1 // loop_footer
      %s23 = sadd.s32 1, %s19
    $region7: #{tpu_custom_call.1} parent=1 // loop_footer_branch
      %18 = sbr.rel target = $region3
    $region8: #{tpu_custom_call.1} parent=1 // loop_exit
      _
    %954 = vsyncpa [#allocation3], 1
    %s955 = scalar_lea.sflag [#allocation3], 1
    %956 = vsyncpa %s955, 1
    %957 = vsyncpa [#allocation5], 1
    %s958 = scalar_lea.sflag [#allocation5], 1
    %959 = vsyncpa %s958, 1

</llo_original>
